<compile_context>
chip_gen: v6e
topology: v6e:2x2x1
jax: 0.10.0
libtpu: 0.0.40
codegen_flags: <defaults>
</compile_context>

<pallas_src>
import jax
import jax.numpy as jnp
from jax.experimental import pallas as pl
from jax.experimental.pallas import tpu as pltpu


def _round_up(v, m):
    return (v + m - 1) // m * m


def audio_mlp_kernel(x_ref, w1_ref, b1_ref, w2_ref, b2_ref, w3_ref, b3_ref,
                     o_ref):
    # Pooling already folded into w1 (w1_eff) in the wrapper.
    x = x_ref[...]                                                  # (TB, FINP) bf16
    h1 = jnp.dot(x, w1_ref[...], preferred_element_type=jnp.float32) + b1_ref[...]
    h1 = jnp.maximum(h1, 0.0)                                       # relu(fc1)
    # TODO(synk): nn.Dropout(0.3) is identity at inference; training-mode RNG mask not implemented.
    h2 = jnp.dot(h1.astype(w2_ref.dtype), w2_ref[...],
                 preferred_element_type=jnp.float32) + b2_ref[...]
    h2 = jnp.maximum(h2, 0.0)                                       # relu(fc2)
    out = jnp.dot(h2.astype(w3_ref.dtype), w3_ref[...],
                  preferred_element_type=jnp.float32) + b3_ref[...]
    o_ref[...] = out.astype(o_ref.dtype)                            # fc3


def audio_mlp_forward(x, params, time_reduce, compute_dtype=jnp.bfloat16):
    """x: (B, C, n_mels, T); params = (w1, b1, w2, b2, w3, b3)."""
    w1, b1, w2, b2, w3, b3 = params
    B, C, M, T = x.shape

    # PyTorch AvgPool1d(kernel=stride=time_reduce) silently drops a ragged tail.
    n_steps = T // time_reduce
    T_trunc = n_steps * time_reduce
    if T_trunc != T:
        x = x[..., :T_trunc]

    fin = C * M * T_trunc
    fpool = C * M * n_steps
    assert fpool == w1.shape[0], "fc1 fan-in mismatch with pooled feature count"

    h1s, h2s, out_size = w1.shape[1], w2.shape[1], w3.shape[1]

    # Fold AvgPool1d + Flatten into fc1:  x_flat @ w1_eff == pooled_flat @ w1.
    w1_eff = jnp.repeat(w1, time_reduce, axis=0) / float(time_reduce)   # (fin, h1)

    # Lane padding to multiples of 128 (unmasked, lane-dense stores).
    FINP = _round_up(fin, 128)
    H1P = _round_up(h1s, 128)
    H2P = _round_up(h2s, 128)
    OUTP = _round_up(out_size, 128)

    # Batch tile: multiple of 8 sublanes, capped at 256, shrunk to fit VMEM.
    TILE_B = _round_up(min(B, 256), 8)

    def vmem_estimate(tb):
        x_buf = 2 * tb * FINP * 2                       # double-buffered bf16 x tile
        o_buf = 2 * tb * OUTP * 4                       # double-buffered f32 out tile
        w_buf = 2 * ((FINP * H1P + H1P * H2P + H2P * OUTP) * 2
                     + (H1P + H2P + OUTP) * 4)          # resident weights/biases
        return x_buf + o_buf + w_buf

    while vmem_estimate(TILE_B) > 24 * 1024 * 1024 and TILE_B > 8:
        TILE_B = max(8, _round_up(TILE_B // 2, 8))

    B_pad = _round_up(B, TILE_B)

    # Pad + cast operands (glue only; element order identical to torch's
    # pool -> reshape -> Flatten path).
    x_flat = x.reshape(B, fin)
    x_p = jnp.pad(x_flat, ((0, B_pad - B), (0, FINP - fin))).astype(compute_dtype)

    def pad2(a, r, c):
        return jnp.pad(a, ((0, r - a.shape[0]), (0, c - a.shape[1])))

    w1p = pad2(w1_eff, FINP, H1P).astype(compute_dtype)
    b1p = pad2(b1, 1, H1P).astype(jnp.float32)
    w2p = pad2(w2, H1P, H2P).astype(compute_dtype)
    b2p = pad2(b2, 1, H2P).astype(jnp.float32)
    w3p = pad2(w3, H2P, OUTP).astype(compute_dtype)
    b3p = pad2(b3, 1, OUTP).astype(jnp.float32)

    operands = (x_p, w1p, b1p, w2p, b2p, w3p, b3p)

    flops = 2 * B_pad * (FINP * H1P + H1P * H2P + H2P * OUTP)
    bytes_accessed = (sum(int(a.size) * a.dtype.itemsize for a in operands)
                      + B_pad * OUTP * 4)

    vmem_limit = int(min(64 * 1024 * 1024,
                         max(32 * 1024 * 1024, 2 * vmem_estimate(TILE_B))))

    out_pad = pl.pallas_call(
        audio_mlp_kernel,
        out_shape=jax.ShapeDtypeStruct((B_pad, OUTP), jnp.float32),
        grid=(B_pad // TILE_B,),
        in_specs=[
            pl.BlockSpec((TILE_B, FINP), lambda i: (i, 0)),   # x: tiled over batch
            pl.BlockSpec((FINP, H1P), lambda i: (0, 0)),      # weights: VMEM-resident
            pl.BlockSpec((1, H1P), lambda i: (0, 0)),
            pl.BlockSpec((H1P, H2P), lambda i: (0, 0)),
            pl.BlockSpec((1, H2P), lambda i: (0, 0)),
            pl.BlockSpec((H2P, OUTP), lambda i: (0, 0)),
            pl.BlockSpec((1, OUTP), lambda i: (0, 0)),
        ],
        out_specs=pl.BlockSpec((TILE_B, OUTP), lambda i: (i, 0)),
        compiler_params=pltpu.CompilerParams(
            dimension_semantics=("parallel",),
            vmem_limit_bytes=vmem_limit),
        cost_estimate=pl.CostEstimate(flops=flops, transcendentals=0,
                                      bytes_accessed=bytes_accessed),
    )(*operands)

    return out_pad[:B, :out_size]


def init_params(key, in_features, h1, h2, out_size):
    """Deterministic PyTorch-nn.Linear-style init: U(-1/sqrt(fan_in), 1/sqrt(fan_in))."""
    ks = jax.random.split(key, 6)

    def linear(kw, kb, fan_in, fan_out):
        bound = 1.0 / (fan_in ** 0.5)
        w = jax.random.uniform(kw, (fan_in, fan_out), jnp.float32, -bound, bound)
        b = jax.random.uniform(kb, (1, fan_out), jnp.float32, -bound, bound)
        return w, b

    w1, b1 = linear(ks[0], ks[1], in_features, h1)
    w2, b2 = linear(ks[2], ks[3], h1, h2)
    w3, b3 = linear(ks[4], ks[5], h2, out_size)
    return (w1, b1, w2, b2, w3, b3)


def reference_forward(x, params, time_reduce):
    """Pure-JAX f32 mirror of the PyTorch forward (dropout in eval mode)."""
    B, C, M, T = x.shape
    n_steps = T // time_reduce
    x = x[..., :n_steps * time_reduce]
    xr = x.reshape(-1, 1, n_steps * time_reduce)
    pooled = xr.reshape(xr.shape[0], 1, n_steps, time_reduce).mean(-1)
    pooled = pooled.reshape(B, C, M, -1)
    flat = pooled.reshape(B, -1)
    w1, b1, w2, b2, w3, b3 = params
    h1 = jax.nn.relu(flat @ w1 + b1)
    h2 = jax.nn.relu(h1 @ w2 + b2)
    return h2 @ w3 + b3


if __name__ == "__main__":
    # Module hyperparams (small, consistent with the forward):
    n_mels, n_steps, time_reduce = 16, 8, 2
    hidden1, hidden2, output_size = 32, 32, 10
    B, C = 2, 1
    T = n_steps * time_reduce                      # raw time axis before pooling

    key = jax.random.PRNGKey(0)
    kx, kp = jax.random.split(key)
    x = jax.random.normal(kx, (B, C, n_mels, T), dtype=jnp.float32)
    params = init_params(kp, n_steps * n_mels, hidden1, hidden2, output_size)

    out = audio_mlp_forward(x, params, time_reduce)
    out = jax.block_until_ready(out)

    ref = reference_forward(x, params, time_reduce)
    assert out.shape == (B, output_size)
    # bf16 inputs/weights (f32 accumulation) => slightly relaxed tolerance.
    assert jnp.allclose(out, ref, atol=2e-2, rtol=2e-2), "mismatch vs reference"
    print("KERNEL_OK")
</pallas_src>

<mosaic_0001>
module attributes {stable_mosaic.version = 11 : i64} {
  func.func @audio_mlp_kernel(%arg0: i32, %arg1: memref<8x256xbf16, #tpu.memory_space<vmem>>, %arg2: memref<256x128xbf16, #tpu.memory_space<vmem>>, %arg3: memref<1x128xf32, #tpu.memory_space<vmem>>, %arg4: memref<128x128xbf16, #tpu.memory_space<vmem>>, %arg5: memref<1x128xf32, #tpu.memory_space<vmem>>, %arg6: memref<128x128xbf16, #tpu.memory_space<vmem>>, %arg7: memref<1x128xf32, #tpu.memory_space<vmem>>, %arg8: memref<8x128xf32, #tpu.memory_space<vmem>>) attributes {dimension_semantics = [#tpu.dimension_semantics<parallel>], iteration_bounds = array<i64: 1>, scalar_prefetch = 0 : i64, scratch_operands = 0 : i64, tpu.core_type = #tpu.core_type<tc>, window_params = [{transform_indices = @transform_0, window_bounds = array<i64: 8, 256>}, {pipeline_mode = #tpu.pipeline_mode<synchronous>, transform_indices = @transform_1, window_bounds = array<i64: 256, 128>}, {pipeline_mode = #tpu.pipeline_mode<synchronous>, transform_indices = @transform_2, window_bounds = array<i64: 1, 128>}, {pipeline_mode = #tpu.pipeline_mode<synchronous>, transform_indices = @transform_3, window_bounds = array<i64: 128, 128>}, {pipeline_mode = #tpu.pipeline_mode<synchronous>, transform_indices = @transform_4, window_bounds = array<i64: 1, 128>}, {pipeline_mode = #tpu.pipeline_mode<synchronous>, transform_indices = @transform_5, window_bounds = array<i64: 128, 128>}, {pipeline_mode = #tpu.pipeline_mode<synchronous>, transform_indices = @transform_6, window_bounds = array<i64: 1, 128>}, {transform_indices = @transform_7, window_bounds = array<i64: 8, 128>}]} {
    %c0 = arith.constant 0 : index
    %c0_0 = arith.constant 0 : index
    %0 = vector.load %arg1[%c0, %c0_0] : memref<8x256xbf16, #tpu.memory_space<vmem>>, vector<8x256xbf16>
    %c0_1 = arith.constant 0 : index
    %c0_2 = arith.constant 0 : index
    %1 = vector.load %arg2[%c0_1, %c0_2] : memref<256x128xbf16, #tpu.memory_space<vmem>>, vector<256x128xbf16>
    %cst = arith.constant dense<0.000000e+00> : vector<8x128xf32>
    %2 = tpu.matmul %0, %1, %cst {dimension_numbers = #tpu.dot_dimension_numbers<[1], [0], [0], [1], [0, 0, 1, 1], [], []>} : vector<8x256xbf16>, vector<256x128xbf16>, vector<8x128xf32> -> vector<8x128xf32>
    %c0_3 = arith.constant 0 : index
    %c0_4 = arith.constant 0 : index
    %3 = vector.load %arg3[%c0_3, %c0_4] : memref<1x128xf32, #tpu.memory_space<vmem>>, vector<1x128xf32>
    %4 = vector.broadcast %3 : vector<1x128xf32> to vector<8x128xf32>
    %5 = arith.addf %2, %4 : vector<8x128xf32>
    %cst_5 = arith.constant 0.000000e+00 : f32
    %6 = vector.broadcast %cst_5 : f32 to vector<8x128xf32>
    %7 = arith.maximumf %5, %6 : vector<8x128xf32>
    %8 = arith.truncf %7 : vector<8x128xf32> to vector<8x128xbf16>
    %c0_6 = arith.constant 0 : index
    %c0_7 = arith.constant 0 : index
    %9 = vector.load %arg4[%c0_6, %c0_7] : memref<128x128xbf16, #tpu.memory_space<vmem>>, vector<128x128xbf16>
    %cst_8 = arith.constant dense<0.000000e+00> : vector<8x128xf32>
    %10 = tpu.matmul %8, %9, %cst_8 {dimension_numbers = #tpu.dot_dimension_numbers<[1], [0], [0], [1], [0, 0, 1, 1], [], []>} : vector<8x128xbf16>, vector<128x128xbf16>, vector<8x128xf32> -> vector<8x128xf32>
    %c0_9 = arith.constant 0 : index
    %c0_10 = arith.constant 0 : index
    %11 = vector.load %arg5[%c0_9, %c0_10] : memref<1x128xf32, #tpu.memory_space<vmem>>, vector<1x128xf32>
    %12 = vector.broadcast %11 : vector<1x128xf32> to vector<8x128xf32>
    %13 = arith.addf %10, %12 : vector<8x128xf32>
    %cst_11 = arith.constant 0.000000e+00 : f32
    %14 = vector.broadcast %cst_11 : f32 to vector<8x128xf32>
    %15 = arith.maximumf %13, %14 : vector<8x128xf32>
    %16 = arith.truncf %15 : vector<8x128xf32> to vector<8x128xbf16>
    %c0_12 = arith.constant 0 : index
    %c0_13 = arith.constant 0 : index
    %17 = vector.load %arg6[%c0_12, %c0_13] : memref<128x128xbf16, #tpu.memory_space<vmem>>, vector<128x128xbf16>
    %cst_14 = arith.constant dense<0.000000e+00> : vector<8x128xf32>
    %18 = tpu.matmul %16, %17, %cst_14 {dimension_numbers = #tpu.dot_dimension_numbers<[1], [0], [0], [1], [0, 0, 1, 1], [], []>} : vector<8x128xbf16>, vector<128x128xbf16>, vector<8x128xf32> -> vector<8x128xf32>
    %c0_15 = arith.constant 0 : index
    %c0_16 = arith.constant 0 : index
    %19 = vector.load %arg7[%c0_15, %c0_16] : memref<1x128xf32, #tpu.memory_space<vmem>>, vector<1x128xf32>
    %20 = vector.broadcast %19 : vector<1x128xf32> to vector<8x128xf32>
    %21 = arith.addf %18, %20 : vector<8x128xf32>
    %c0_17 = arith.constant 0 : index
    %c0_18 = arith.constant 0 : index
    %22 = vector.load %arg8[%c0_17, %c0_18] : memref<8x128xf32, #tpu.memory_space<vmem>>, vector<8x128xf32>
    tpu.vector_store %arg8[%c0_17, %c0_18], %21 {strides = array<i32>} : memref<8x128xf32, #tpu.memory_space<vmem>>, vector<8x128xf32>,
    return
  }
  func.func @transform_0(%arg0: i32) -> (i32, i32) {
    %c0_i32 = arith.constant 0 : i32
    %c0_i32_0 = arith.constant 0 : i32
    return %arg0, %c0_i32 : i32, i32
  }
  func.func @transform_1(%arg0: i32) -> (i32, i32) {
    %c0_i32 = arith.constant 0 : i32
    %c0_i32_0 = arith.constant 0 : i32
    %c0_i32_1 = arith.constant 0 : i32
    return %c0_i32, %c0_i32_0 : i32, i32
  }
  func.func @transform_2(%arg0: i32) -> (i32, i32) {
    %c0_i32 = arith.constant 0 : i32
    %c0_i32_0 = arith.constant 0 : i32
    %c0_i32_1 = arith.constant 0 : i32
    return %c0_i32, %c0_i32_0 : i32, i32
  }
  func.func @transform_3(%arg0: i32) -> (i32, i32) {
    %c0_i32 = arith.constant 0 : i32
    %c0_i32_0 = arith.constant 0 : i32
    %c0_i32_1 = arith.constant 0 : i32
    return %c0_i32, %c0_i32_0 : i32, i32
  }
  func.func @transform_4(%arg0: i32) -> (i32, i32) {
    %c0_i32 = arith.constant 0 : i32
    %c0_i32_0 = arith.constant 0 : i32
    %c0_i32_1 = arith.constant 0 : i32
    return %c0_i32, %c0_i32_0 : i32, i32
  }
  func.func @transform_5(%arg0: i32) -> (i32, i32) {
    %c0_i32 = arith.constant 0 : i32
    %c0_i32_0 = arith.constant 0 : i32
    %c0_i32_1 = arith.constant 0 : i32
    return %c0_i32, %c0_i32_0 : i32, i32
  }
  func.func @transform_6(%arg0: i32) -> (i32, i32) {
    %c0_i32 = arith.constant 0 : i32
    %c0_i32_0 = arith.constant 0 : i32
    %c0_i32_1 = arith.constant 0 : i32
    return %c0_i32, %c0_i32_0 : i32, i32
  }
  func.func @transform_7(%arg0: i32) -> (i32, i32) {
    %c0_i32 = arith.constant 0 : i32
    %c0_i32_0 = arith.constant 0 : i32
    return %arg0, %c0_i32 : i32, i32
  }
}

</mosaic_0001>

<llo_original>
// kernel: tpu_custom_call.1
$region0: #{tpu_custom_call.1}
  #allocation0 [shape = 'u32[]', space=smem, size = 0x4, offset = 0x4, fixed_abs, tag = 'smem constant byte address 0x4 - core index']
  #allocation1 [shape = 'u32[144,128]{1,0:T(1,128)}', space=vmem, size = 0x12000, scoped, tag = 'internal scratch']
  %s0 = inlined_call_operand.hbm [shape: bf16[8,256], index: 0, kind: input, shape index: {}]
  %s1 = inlined_call_operand.hbm [shape: bf16[256,128], index: 1, kind: input, shape index: {}]
  %s2 = inlined_call_operand.vmem [shape: f32[1,128], index: 2, kind: input, shape index: {}]
  %s3 = inlined_call_operand.hbm [shape: bf16[128,128], index: 3, kind: input, shape index: {}]
  %s4 = inlined_call_operand.vmem [shape: f32[1,128], index: 4, kind: input, shape index: {}]
  %s5 = inlined_call_operand.hbm [shape: bf16[128,128], index: 5, kind: input, shape index: {}]
  %s6 = inlined_call_operand.vmem [shape: f32[1,128], index: 6, kind: input, shape index: {}]
  %s7 = inlined_call_operand.hbm [shape: f32[8,128], index: 7, kind: output, shape index: {}]
  %s8 = sld [smem:[#allocation0]]
  $region54: #{tpu_custom_call.1} parent=0
    _
  %s10 = ssub.s32 1, %s8
  %s11 = scalar_select 0, %s10, %s8
  $region1: #{tpu_custom_call.1} parent=0
    #allocation2 [shape = 'u8[4096]{0}', space=vmem, size = 0x1000, scoped, tag = 'input window, operand 0, single buffered']
    #allocation3 [shape = 's32[1]{0}', space=sflag, size = 0x4, scoped, tag = 'scoped memory for tpu_custom_call.1']
    #allocation4 [shape = 's32[1]{0}', space=sflag, size = 0x4, scoped, tag = 'scoped memory for tpu_custom_call.1']
    #allocation5 [shape = 'u8[65536]{0}', space=vmem, size = 0x10000, scoped, tag = 'input window, operand 1, single buffered']
    #allocation6 [shape = 's32[1]{0}', space=sflag, size = 0x4, scoped, tag = 'scoped memory for tpu_custom_call.1']
    #allocation7 [shape = 'u8[32768]{0}', space=vmem, size = 0x8000, scoped, tag = 'input window, operand 3, single buffered']
    #allocation8 [shape = 'u8[32768]{0}', space=vmem, size = 0x8000, scoped, tag = 'input window, operand 5, single buffered']
    #allocation9 [shape = 's32[1]{0}', space=sflag, size = 0x4, scoped, tag = 'scoped memory for tpu_custom_call.1']
    #allocation10 [shape = 'u8[4096]{0}', space=vmem, size = 0x1000, scoped, tag = 'output window, operand 0, single buffered']
    %12 = vsyncpa [#allocation3], 0
    %13 = vsyncpa [#allocation6], 0
    %14 = vsyncpa [#allocation9], 0
    %15 = vsyncpa [#allocation4], 0
    // Predicated region
    $region2: #{tpu_custom_call.1} parent=1 // pred_check
      _
    $region3: #{tpu_custom_call.1} parent=1 // pred_check_branch
      %17 = sbr.rel (0) target = $region5
    $region4: #{tpu_custom_call.1} parent=1 // pred_region
      %s19 = ssub.s32 128, 128
      %20 = vsyncadd [#allocation3], %s19
      %s22 = sshll.u32 [#allocation2], 4
      %s23 = int_to_ptr.vmem [resolvable:$true] %s22
      %25 = dma.hbm_to_vmem [thread:$0]  %s0, 128, %s23, [#allocation3]
    $region5: #{tpu_custom_call.1} parent=1 // pred_fallthru
      _
    // Predicated region
    $region6: #{tpu_custom_call.1} parent=1 // pred_check
      _
    $region7: #{tpu_custom_call.1} parent=1 // pred_check_branch
      %27 = sbr.rel (0) target = $region9
    $region8: #{tpu_custom_call.1} parent=1 // pred_region
      %s29 = ssub.s32 2048, 2048
      %30 = vsyncadd [#allocation6], %s29
      %s31 = sshll.u32 [#allocation5], 4
      %s32 = int_to_ptr.vmem [resolvable:$true] %s31
      %37 = dma.hbm_to_vmem [thread:$0]  %s1, 2048, %s32, [#allocation6], 64, 64, 4
    $region9: #{tpu_custom_call.1} parent=1 // pred_fallthru
      _
    // Predicated region
    $region10: #{tpu_custom_call.1} parent=1 // pred_check
      _
    $region11: #{tpu_custom_call.1} parent=1 // pred_check_branch
      %39 = sbr.rel (0) target = $region13
    $region12: #{tpu_custom_call.1} parent=1 // pred_region
      _
    $region13: #{tpu_custom_call.1} parent=1 // pred_fallthru
      _
    // Predicated region
    $region14: #{tpu_custom_call.1} parent=1 // pred_check
      _
    $region15: #{tpu_custom_call.1} parent=1 // pred_check_branch
      %41 = sbr.rel (0) target = $region17
    $region16: #{tpu_custom_call.1} parent=1 // pred_region
      %s43 = ssub.s32 1024, 1024
      %44 = vsyncadd [#allocation6], %s43
      %s45 = sshll.u32 [#allocation7], 4
      %s46 = int_to_ptr.vmem [resolvable:$true] %s45
      %51 = dma.hbm_to_vmem [thread:$0]  %s3, 1024, %s46, [#allocation6], 64, 64, 4
    $region17: #{tpu_custom_call.1} parent=1 // pred_fallthru
      _
    // Predicated region
    $region18: #{tpu_custom_call.1} parent=1 // pred_check
      _
    $region19: #{tpu_custom_call.1} parent=1 // pred_check_branch
      %53 = sbr.rel (0) target = $region21
    $region20: #{tpu_custom_call.1} parent=1 // pred_region
      _
    $region21: #{tpu_custom_call.1} parent=1 // pred_fallthru
      _
    // Predicated region
    $region22: #{tpu_custom_call.1} parent=1 // pred_check
      _
    $region23: #{tpu_custom_call.1} parent=1 // pred_check_branch
      %55 = sbr.rel (0) target = $region25
    $region24: #{tpu_custom_call.1} parent=1 // pred_region
      %s57 = ssub.s32 1024, 1024
      %58 = vsyncadd [#allocation9], %s57
      %s59 = sshll.u32 [#allocation8], 4
      %s60 = int_to_ptr.vmem [resolvable:$true] %s59
      %65 = dma.hbm_to_vmem [thread:$0]  %s5, 1024, %s60, [#allocation9], 64, 64, 4
    $region25: #{tpu_custom_call.1} parent=1 // pred_fallthru
      _
    // Predicated region
    $region26: #{tpu_custom_call.1} parent=1 // pred_check
      _
    $region27: #{tpu_custom_call.1} parent=1 // pred_check_branch
      %67 = sbr.rel (0) target = $region29
    $region28: #{tpu_custom_call.1} parent=1 // pred_region
      _
    $region29: #{tpu_custom_call.1} parent=1 // pred_fallthru
      _
    // Predicated region
    $region30: #{tpu_custom_call.1} parent=1 // pred_check
      _
    $region31: #{tpu_custom_call.1} parent=1 // pred_check_branch
      %69 = sbr.rel (0) target = $region33
    $region32: #{tpu_custom_call.1} parent=1 // pred_region
      %70 = dma.done [#allocation3], 128
    $region33: #{tpu_custom_call.1} parent=1 // pred_fallthru
      _
    // Predicated region
    $region34: #{tpu_custom_call.1} parent=1 // pred_check
      _
    $region35: #{tpu_custom_call.1} parent=1 // pred_check_branch
      %72 = sbr.rel (0) target = $region37
    $region36: #{tpu_custom_call.1} parent=1 // pred_region
      %73 = dma.done [#allocation6], 2048
    $region37: #{tpu_custom_call.1} parent=1 // pred_fallthru
      _
    // Predicated region
    $region38: #{tpu_custom_call.1} parent=1 // pred_check
      _
    $region39: #{tpu_custom_call.1} parent=1 // pred_check_branch
      %75 = sbr.rel (0) target = $region41
    $region40: #{tpu_custom_call.1} parent=1 // pred_region
      %76 = dma.done [#allocation6], 1024
    $region41: #{tpu_custom_call.1} parent=1 // pred_fallthru
      _
    // Predicated region
    $region42: #{tpu_custom_call.1} parent=1 // pred_check
      _
    $region43: #{tpu_custom_call.1} parent=1 // pred_check_branch
      %78 = sbr.rel (0) target = $region45
    $region44: #{tpu_custom_call.1} parent=1 // pred_region
      %79 = dma.done [#allocation9], 1024
    $region45: #{tpu_custom_call.1} parent=1 // pred_fallthru
      _
    %v81 = vld [vmem:[#allocation2] sm:$0xff]
    %v82 = vld [vmem:[#allocation5] sm:$0xf]
    %v83 = vld [vmem:[#allocation5 + $0x4] sm:$0xf]
    %v84 = vld [vmem:[#allocation5 + $0x8] sm:$0xf]
    %v85 = vld [vmem:[#allocation5 + $0xc] sm:$0xf]
    %v86 = vld [vmem:[#allocation5 + $0x10] sm:$0xf]
    %v87 = vld [vmem:[#allocation5 + $0x14] sm:$0xf]
    %v88 = vld [vmem:[#allocation5 + $0x18] sm:$0xf]
    %v89 = vld [vmem:[#allocation5 + $0x1c] sm:$0xf]
    %v90 = vld [vmem:[#allocation5 + $0x20] sm:$0xf]
    %v91 = vld [vmem:[#allocation5 + $0x24] sm:$0xf]
    %v92 = vld [vmem:[#allocation5 + $0x28] sm:$0xf]
    %v93 = vld [vmem:[#allocation5 + $0x2c] sm:$0xf]
    %v94 = vld [vmem:[#allocation5 + $0x30] sm:$0xf]
    %v95 = vld [vmem:[#allocation5 + $0x34] sm:$0xf]
    %v96 = vld [vmem:[#allocation5 + $0x38] sm:$0xf]
    %v97 = vld [vmem:[#allocation5 + $0x3c] sm:$0xf]
    %v98 = vld [vmem:[#allocation5 + $0x40] sm:$0xf]
    %v99 = vld [vmem:[#allocation5 + $0x44] sm:$0xf]
    %v100 = vld [vmem:[#allocation5 + $0x48] sm:$0xf]
    %v101 = vld [vmem:[#allocation5 + $0x4c] sm:$0xf]
    %v102 = vld [vmem:[#allocation5 + $0x50] sm:$0xf]
    %v103 = vld [vmem:[#allocation5 + $0x54] sm:$0xf]
    %v104 = vld [vmem:[#allocation5 + $0x58] sm:$0xf]
    %v105 = vld [vmem:[#allocation5 + $0x5c] sm:$0xf]
    %v106 = vld [vmem:[#allocation5 + $0x60] sm:$0xf]
    %v107 = vld [vmem:[#allocation5 + $0x64] sm:$0xf]
    %v108 = vld [vmem:[#allocation5 + $0x68] sm:$0xf]
    %v109 = vld [vmem:[#allocation5 + $0x6c] sm:$0xf]
    %v110 = vld [vmem:[#allocation5 + $0x70] sm:$0xf]
    %v111 = vld [vmem:[#allocation5 + $0x74] sm:$0xf]
    %v112 = vld [vmem:[#allocation5 + $0x78] sm:$0xf]
    %v113 = vld [vmem:[#allocation5 + $0x7c] sm:$0xf]
    %v114 = vld [vmem:[%s2] sm:$0x1]
    %v116 = vlaneseq
    %v117 = vshrl.u32 %v116, 7
    %v118 = vsub.s32 0, %v117
    %v119 = vrot.slane %v114, %v118
    %v122 = vunpack.c.l.b16 %v81
    %v123 = vunpack.c.h.b16 %v81
    %v124 = vpack.c.b16 %v122, %v122
    %v125 = vpack.c.b16 %v123, %v123
    %v160 = vunpack.c.l.b16 %v82
    %v161 = vunpack.c.l.b16 %v83
    %v162 = vunpack.c.l.b16 %v84
    %v163 = vunpack.c.l.b16 %v85
    %v164 = vunpack.c.l.b16 %v86
    %v165 = vunpack.c.l.b16 %v87
    %v166 = vunpack.c.l.b16 %v88
    %v167 = vunpack.c.l.b16 %v89
    %v168 = vunpack.c.l.b16 %v90
    %v169 = vunpack.c.l.b16 %v91
    %v170 = vunpack.c.l.b16 %v92
    %v171 = vunpack.c.l.b16 %v93
    %v172 = vunpack.c.l.b16 %v94
    %v173 = vunpack.c.l.b16 %v95
    %v174 = vunpack.c.l.b16 %v96
    %v175 = vunpack.c.l.b16 %v97
    %v176 = vunpack.c.l.b16 %v98
    %v177 = vunpack.c.l.b16 %v99
    %v178 = vunpack.c.l.b16 %v100
    %v179 = vunpack.c.l.b16 %v101
    %v180 = vunpack.c.l.b16 %v102
    %v181 = vunpack.c.l.b16 %v103
    %v182 = vunpack.c.l.b16 %v104
    %v183 = vunpack.c.l.b16 %v105
    %v184 = vunpack.c.l.b16 %v106
    %v185 = vunpack.c.l.b16 %v107
    %v186 = vunpack.c.l.b16 %v108
    %v187 = vunpack.c.l.b16 %v109
    %v188 = vunpack.c.l.b16 %v110
    %v189 = vunpack.c.l.b16 %v111
    %v190 = vunpack.c.l.b16 %v112
    %v191 = vunpack.c.l.b16 %v113
    %v192 = vpack.c.b16 %v161, %v160
    %v193 = vpack.c.b16 %v163, %v162
    %v194 = vpack.c.b16 %v165, %v164
    %v195 = vpack.c.b16 %v167, %v166
    %v196 = vpack.c.b16 %v169, %v168
    %v197 = vpack.c.b16 %v171, %v170
    %v198 = vpack.c.b16 %v173, %v172
    %v199 = vpack.c.b16 %v175, %v174
    %v200 = vpack.c.b16 %v177, %v176
    %v201 = vpack.c.b16 %v179, %v178
    %v202 = vpack.c.b16 %v181, %v180
    %v203 = vpack.c.b16 %v183, %v182
    %v204 = vpack.c.b16 %v185, %v184
    %v205 = vpack.c.b16 %v187, %v186
    %v206 = vpack.c.b16 %v189, %v188
    %v207 = vpack.c.b16 %v191, %v190
    %224 = vmatprep.subr.bf16.mxu0 0
    %225 = vmatpush1.bf16.msra.mxu0 %v199
    %226 = vmatprep.subr.bf16.mxu0 0
    %227 = vmatpush1.bf16.msra.mxu0 %v198
    %228 = vmatprep.subr.bf16.mxu0 0
    %229 = vmatpush1.bf16.msra.mxu0 %v197
    %230 = vmatprep.subr.bf16.mxu0 0
    %231 = vmatpush1.bf16.msra.mxu0 %v196
    %232 = vmatprep.subr.bf16.mxu0 0
    %233 = vmatpush1.bf16.msra.mxu0 %v195
    %234 = vmatprep.subr.bf16.mxu0 0
    %235 = vmatpush1.bf16.msra.mxu0 %v194
    %236 = vmatprep.subr.bf16.mxu0 0
    %237 = vmatpush1.bf16.msra.mxu0 %v193
    %238 = vmatprep.subr.bf16.mxu0 0
    %239 = vmatpush1.bf16.msra.mxu0 %v192
    %240 = vmatprep.subr.bf16.mxu0 0
    %241 = vmatpush2.bf16.msra.mxu0 %v207
    %242 = vmatprep.subr.bf16.mxu0 0
    %243 = vmatpush2.bf16.msra.mxu0 %v206
    %244 = vmatprep.subr.bf16.mxu0 0
    %245 = vmatpush2.bf16.msra.mxu0 %v205
    %246 = vmatprep.subr.bf16.mxu0 0
    %247 = vmatpush2.bf16.msra.mxu0 %v204
    %248 = vmatprep.subr.bf16.mxu0 0
    %249 = vmatpush2.bf16.msra.mxu0 %v203
    %250 = vmatprep.subr.bf16.mxu0 0
    %251 = vmatpush2.bf16.msra.mxu0 %v202
    %252 = vmatprep.subr.bf16.mxu0 0
    %253 = vmatpush2.bf16.msra.mxu0 %v201
    %254 = vmatprep.subr.bf16.mxu0 0
    %255 = vmatpush2.bf16.msra.mxu0 %v200
    %256 = vmatprep.mubr.bf16.mxu0 %v125
    %257 = vmatmul.mubr.bf16.gmra.mxu0 %v124
    %v258 = vpop.f32.mrf.mxu0
    %v259 = vadd.f32 %v119, %v258
    %v260 = vpop.f32.mrf.mxu0
    %v261 = vpop.f32.mrf.mxu0
    %v262 = vpop.f32.mrf.mxu0
    %263 = vdwg.mxu0
    %v264 = vmax.f32 %v259, 0.0
    %v265 = vpack.c.bf16 %v264, %v264
    %v266 = vld [vmem:[#allocation7] sm:$0xf]
    %v267 = vld [vmem:[#allocation7 + $0x4] sm:$0xf]
    %v268 = vld [vmem:[#allocation7 + $0x8] sm:$0xf]
    %v269 = vld [vmem:[#allocation7 + $0xc] sm:$0xf]
    %v270 = vld [vmem:[#allocation7 + $0x10] sm:$0xf]
    %v271 = vld [vmem:[#allocation7 + $0x14] sm:$0xf]
    %v272 = vld [vmem:[#allocation7 + $0x18] sm:$0xf]
    %v273 = vld [vmem:[#allocation7 + $0x1c] sm:$0xf]
    %v274 = vld [vmem:[#allocation7 + $0x20] sm:$0xf]
    %v275 = vld [vmem:[#allocation7 + $0x24] sm:$0xf]
    %v276 = vld [vmem:[#allocation7 + $0x28] sm:$0xf]
    %v277 = vld [vmem:[#allocation7 + $0x2c] sm:$0xf]
    %v278 = vld [vmem:[#allocation7 + $0x30] sm:$0xf]
    %v279 = vld [vmem:[#allocation7 + $0x34] sm:$0xf]
    %v280 = vld [vmem:[#allocation7 + $0x38] sm:$0xf]
    %v281 = vld [vmem:[#allocation7 + $0x3c] sm:$0xf]
    %v282 = vld [vmem:[%s4] sm:$0x1]
    %v284 = vlaneseq
    %v285 = vshrl.u32 %v284, 7
    %v286 = vsub.s32 0, %v285
    %v287 = vrot.slane %v282, %v286
    %v305 = vunpack.c.l.b16 %v266
    %v306 = vunpack.c.l.b16 %v267
    %v307 = vunpack.c.l.b16 %v268
    %v308 = vunpack.c.l.b16 %v269
    %v309 = vunpack.c.l.b16 %v270
    %v310 = vunpack.c.l.b16 %v271
    %v311 = vunpack.c.l.b16 %v272
    %v312 = vunpack.c.l.b16 %v273
    %v313 = vunpack.c.l.b16 %v274
    %v314 = vunpack.c.l.b16 %v275
    %v315 = vunpack.c.l.b16 %v276
    %v316 = vunpack.c.l.b16 %v277
    %v317 = vunpack.c.l.b16 %v278
    %v318 = vunpack.c.l.b16 %v279
    %v319 = vunpack.c.l.b16 %v280
    %v320 = vunpack.c.l.b16 %v281
    %v321 = vpack.c.b16 %v306, %v305
    %v322 = vpack.c.b16 %v308, %v307
    %v323 = vpack.c.b16 %v310, %v309
    %v324 = vpack.c.b16 %v312, %v311
    %v325 = vpack.c.b16 %v314, %v313
    %v326 = vpack.c.b16 %v316, %v315
    %v327 = vpack.c.b16 %v318, %v317
    %v328 = vpack.c.b16 %v320, %v319
    %337 = vmatprep.subr.bf16.mxu0 0
    %338 = vmatpush1.bf16.msra.mxu0 %v328
    %339 = vmatprep.subr.bf16.mxu0 0
    %340 = vmatpush1.bf16.msra.mxu0 %v327
    %341 = vmatprep.subr.bf16.mxu0 0
    %342 = vmatpush1.bf16.msra.mxu0 %v326
    %343 = vmatprep.subr.bf16.mxu0 0
    %344 = vmatpush1.bf16.msra.mxu0 %v325
    %345 = vmatprep.subr.bf16.mxu0 0
    %346 = vmatpush1.bf16.msra.mxu0 %v324
    %347 = vmatprep.subr.bf16.mxu0 0
    %348 = vmatpush1.bf16.msra.mxu0 %v323
    %349 = vmatprep.subr.bf16.mxu0 0
    %350 = vmatpush1.bf16.msra.mxu0 %v322
    %351 = vmatprep.subr.bf16.mxu0 0
    %352 = vmatpush1.bf16.msra.mxu0 %v321
    %353 = vmatprep.subr.bf16.mxu0 0
    %354 = vmatpush2.bf16.msra.mxu0 0
    %355 = vmatprep.subr.bf16.mxu0 0
    %356 = vmatpush2.bf16.msra.mxu0 0
    %357 = vmatprep.subr.bf16.mxu0 0
    %358 = vmatpush2.bf16.msra.mxu0 0
    %359 = vmatprep.subr.bf16.mxu0 0
    %360 = vmatpush2.bf16.msra.mxu0 0
    %361 = vmatprep.subr.bf16.mxu0 0
    %362 = vmatpush2.bf16.msra.mxu0 0
    %363 = vmatprep.subr.bf16.mxu0 0
    %364 = vmatpush2.bf16.msra.mxu0 0
    %365 = vmatprep.subr.bf16.mxu0 0
    %366 = vmatpush2.bf16.msra.mxu0 0
    %367 = vmatprep.subr.bf16.mxu0 0
    %368 = vmatpush2.bf16.msra.mxu0 0
    %369 = vmatprep.mubr.bf16.mxu0 0
    %370 = vmatmul.mubr.bf16.gmra.mxu0 %v265
    %v371 = vpop.f32.mrf.mxu0
    %v372 = vadd.f32 %v287, %v371
    %v373 = vpop.f32.mrf.mxu0
    %v374 = vpop.f32.mrf.mxu0
    %v375 = vpop.f32.mrf.mxu0
    %376 = vdwg.mxu0
    %v377 = vmax.f32 %v372, 0.0
    %v378 = vpack.c.bf16 %v377, %v377
    %v379 = vld [vmem:[#allocation8] sm:$0xf]
    %v380 = vld [vmem:[#allocation8 + $0x4] sm:$0xf]
    %v381 = vld [vmem:[#allocation8 + $0x8] sm:$0xf]
    %v382 = vld [vmem:[#allocation8 + $0xc] sm:$0xf]
    %v383 = vld [vmem:[#allocation8 + $0x10] sm:$0xf]
    %v384 = vld [vmem:[#allocation8 + $0x14] sm:$0xf]
    %v385 = vld [vmem:[#allocation8 + $0x18] sm:$0xf]
    %v386 = vld [vmem:[#allocation8 + $0x1c] sm:$0xf]
    %v387 = vld [vmem:[#allocation8 + $0x20] sm:$0xf]
    %v388 = vld [vmem:[#allocation8 + $0x24] sm:$0xf]
    %v389 = vld [vmem:[#allocation8 + $0x28] sm:$0xf]
    %v390 = vld [vmem:[#allocation8 + $0x2c] sm:$0xf]
    %v391 = vld [vmem:[#allocation8 + $0x30] sm:$0xf]
    %v392 = vld [vmem:[#allocation8 + $0x34] sm:$0xf]
    %v393 = vld [vmem:[#allocation8 + $0x38] sm:$0xf]
    %v394 = vld [vmem:[#allocation8 + $0x3c] sm:$0xf]
    %v395 = vld [vmem:[%s6] sm:$0x1]
    %v397 = vlaneseq
    %v398 = vshrl.u32 %v397, 7
    %v399 = vsub.s32 0, %v398
    %v400 = vrot.slane %v395, %v399
    %v418 = vunpack.c.l.b16 %v379
    %v419 = vunpack.c.l.b16 %v380
    %v420 = vunpack.c.l.b16 %v381
    %v421 = vunpack.c.l.b16 %v382
    %v422 = vunpack.c.l.b16 %v383
    %v423 = vunpack.c.l.b16 %v384
    %v424 = vunpack.c.l.b16 %v385
    %v425 = vunpack.c.l.b16 %v386
    %v426 = vunpack.c.l.b16 %v387
    %v427 = vunpack.c.l.b16 %v388
    %v428 = vunpack.c.l.b16 %v389
    %v429 = vunpack.c.l.b16 %v390
    %v430 = vunpack.c.l.b16 %v391
    %v431 = vunpack.c.l.b16 %v392
    %v432 = vunpack.c.l.b16 %v393
    %v433 = vunpack.c.l.b16 %v394
    %v434 = vpack.c.b16 %v419, %v418
    %v435 = vpack.c.b16 %v421, %v420
    %v436 = vpack.c.b16 %v423, %v422
    %v437 = vpack.c.b16 %v425, %v424
    %v438 = vpack.c.b16 %v427, %v426
    %v439 = vpack.c.b16 %v429, %v428
    %v440 = vpack.c.b16 %v431, %v430
    %v441 = vpack.c.b16 %v433, %v432
    %450 = vmatprep.subr.bf16.mxu0 0
    %451 = vmatpush1.bf16.msra.mxu0 %v441
    %452 = vmatprep.subr.bf16.mxu0 0
    %453 = vmatpush1.bf16.msra.mxu0 %v440
    %454 = vmatprep.subr.bf16.mxu0 0
    %455 = vmatpush1.bf16.msra.mxu0 %v439
    %456 = vmatprep.subr.bf16.mxu0 0
    %457 = vmatpush1.bf16.msra.mxu0 %v438
    %458 = vmatprep.subr.bf16.mxu0 0
    %459 = vmatpush1.bf16.msra.mxu0 %v437
    %460 = vmatprep.subr.bf16.mxu0 0
    %461 = vmatpush1.bf16.msra.mxu0 %v436
    %462 = vmatprep.subr.bf16.mxu0 0
    %463 = vmatpush1.bf16.msra.mxu0 %v435
    %464 = vmatprep.subr.bf16.mxu0 0
    %465 = vmatpush1.bf16.msra.mxu0 %v434
    %466 = vmatprep.subr.bf16.mxu0 0
    %467 = vmatpush2.bf16.msra.mxu0 0
    %468 = vmatprep.subr.bf16.mxu0 0
    %469 = vmatpush2.bf16.msra.mxu0 0
    %470 = vmatprep.subr.bf16.mxu0 0
    %471 = vmatpush2.bf16.msra.mxu0 0
    %472 = vmatprep.subr.bf16.mxu0 0
    %473 = vmatpush2.bf16.msra.mxu0 0
    %474 = vmatprep.subr.bf16.mxu0 0
    %475 = vmatpush2.bf16.msra.mxu0 0
    %476 = vmatprep.subr.bf16.mxu0 0
    %477 = vmatpush2.bf16.msra.mxu0 0
    %478 = vmatprep.subr.bf16.mxu0 0
    %479 = vmatpush2.bf16.msra.mxu0 0
    %480 = vmatprep.subr.bf16.mxu0 0
    %481 = vmatpush2.bf16.msra.mxu0 0
    %482 = vmatprep.mubr.bf16.mxu0 0
    %483 = vmatmul.mubr.bf16.gmra.mxu0 %v378
    %v484 = vpop.f32.mrf.mxu0
    %v485 = vadd.f32 %v400, %v484
    %v486 = vpop.f32.mrf.mxu0
    %v487 = vpop.f32.mrf.mxu0
    %v488 = vpop.f32.mrf.mxu0
    %489 = vdwg.mxu0
    %490 = vst [vmem:[#allocation10] sm:$0xff] %v485
    // Predicated region
    $region46: #{tpu_custom_call.1} parent=1 // pred_check
      _
    $region47: #{tpu_custom_call.1} parent=1 // pred_check_branch
      %492 = sbr.rel (0) target = $region49
    $region48: #{tpu_custom_call.1} parent=1 // pred_region
      %s494 = ssub.s32 128, 128
      %495 = vsyncadd [#allocation4], %s494
      %s497 = sshll.u32 [#allocation10], 4
      %s498 = int_to_ptr.vmem [resolvable:$true] %s497
      %500 = dma.vmem_to_hbm [thread:$0]  %s498, 128, %s7, [#allocation4]
    $region49: #{tpu_custom_call.1} parent=1 // pred_fallthru
      _
    // Predicated region
    $region50: #{tpu_custom_call.1} parent=1 // pred_check
      _
    $region51: #{tpu_custom_call.1} parent=1 // pred_check_branch
      %502 = sbr.rel (0) target = $region53
    $region52: #{tpu_custom_call.1} parent=1 // pred_region
      %503 = dma.done [#allocation4], 128
    $region53: #{tpu_custom_call.1} parent=1 // pred_fallthru
      _
    %504 = vsyncpa [#allocation3], 1
    %505 = vsyncpa [#allocation6], 1
    %506 = vsyncpa [#allocation9], 1
    %507 = vsyncpa [#allocation4], 1

</llo_original>
